<compile_context>
chip_gen: v5e
topology: v5e:2x2
jax: 0.10.0
libtpu: 0.0.40
codegen_flags: <defaults>
</compile_context>

<pallas_src>
import jax
import jax.numpy as jnp
from jax.experimental import pallas as pl
from jax.experimental.pallas import tpu as pltpu


# ----------------------------- Pallas kernel ------------------------------- #

def _patch_unembed_kernel(x_ref, w_ref, o_ref):
    # x_ref: (tile_rows, Cin)   w_ref: (Cin, N)   o_ref: (tile_rows, N)
    # Operands in the activation dtype, f32 accumulation on the MXU,
    # cast-on-store to the requested output dtype.
    o_ref[...] = jnp.dot(
        x_ref[...], w_ref[...], preferred_element_type=jnp.float32
    ).astype(o_ref.dtype)


# ------------------------------ tiling logic ------------------------------- #

def _pick_tile_rows(rows, bytes_per_row, vmem_budget_bytes):
    """Row-tile size: multiple of 8, double-buffered tiles fit the VMEM
    budget, capped at 2048 rows, and >= 2 grid steps whenever rows allow it
    (so both v7x TensorCores get work)."""
    if rows < 16:
        return rows                                   # single full-dim block
    cap = vmem_budget_bytes // (2 * bytes_per_row)    # 2x for double-buffering
    cap = max(8, (cap // 8) * 8)
    tile = min(2048, cap)
    tile = min(tile, max(8, (rows // 2) // 8 * 8))    # keep >= 2 grid steps
    return tile


# ------------------------------ wrapper ------------------------------------ #

def patch_unembedding_pallas(x, weight, h, w, *, out_dtype=None):
    """x: (B, h*w, hidden); weight: ConvTranspose2d weight (hidden, Cout, p, p).

    Returns (B, Cout, h*p, w*p), matching the PyTorch module output.
    `out_dtype` defaults to x.dtype (dtype passthrough).
    """
    B, T, Cin = x.shape
    Cin_w, Cout, p, p2 = weight.shape
    assert Cin == Cin_w, (Cin, Cin_w)
    assert p == p2, (p, p2)
    assert T == h * w, (T, h, w)
    N = Cout * p * p
    out_dtype = x.dtype if out_dtype is None else jnp.dtype(out_dtype)

    rows = B * T
    x2 = x.reshape(rows, Cin)                 # metadata-only reshape, no copy
    # (Cin, Cout, p, p) -> (Cin, Cout*p*p); column index = co*p*p + pi*p + pj.
    # The weight is tiny; cast it to the activation dtype so MXU operands match.
    w_mat = weight.reshape(Cin, N).astype(x.dtype)

    x_bytes = jnp.dtype(x.dtype).itemsize
    o_bytes = jnp.dtype(out_dtype).itemsize
    bytes_per_row = Cin * x_bytes + N * o_bytes
    w_resident = 2 * Cin * N * x_bytes        # resident (double-buffered) weight
    tile_budget = max(8 * bytes_per_row, 36 * (1 << 20) - w_resident)
    tile = _pick_tile_rows(rows, bytes_per_row, tile_budget)

    grid = (pl.cdiv(rows, tile),)
    vmem_need = 2 * tile * bytes_per_row + w_resident
    vmem_limit = int(min(max(vmem_need + (8 << 20), 32 << 20), 100 << 20))

    cost = pl.CostEstimate(
        flops=2 * rows * Cin * N,
        transcendentals=0,
        bytes_accessed=rows * Cin * x_bytes + Cin * N * x_bytes
        + rows * N * o_bytes,
    )

    y = pl.pallas_call(
        _patch_unembed_kernel,
        out_shape=jax.ShapeDtypeStruct((rows, N), out_dtype),
        grid=grid,
        in_specs=[
            pl.BlockSpec((tile, Cin), lambda r: (r, 0)),   # activation tile
            pl.BlockSpec((Cin, N), lambda r: (0, 0)),      # weights (resident)
        ],
        out_specs=pl.BlockSpec((tile, N), lambda r: (r, 0)),
        compiler_params=pltpu.CompilerParams(
            dimension_semantics=("parallel",),
            vmem_limit_bytes=vmem_limit,
        ),
        cost_estimate=cost,
    )(x2, w_mat)

    # Patch-major slab -> NCHW output of the transposed conv (layout plumbing).
    # TODO(synk): fuse this relayout into the kernel via row-blocked out_specs
    # over (B, Cout, h*p, w*p); the required in-VMEM (w, Cout, p, p) ->
    # (Cout, p, w, p) transpose has tiny minor dims, so it is kept out of the
    # kernel here for lowering robustness.
    y = y.reshape(B, h, w, Cout, p, p)
    y = y.transpose(0, 3, 1, 4, 2, 5)          # (B, Cout, h, p, w, p)
    return y.reshape(B, Cout, h * p, w * p)


# --------------------------- pure-JAX reference ----------------------------- #

def patch_unembedding_ref(x, weight, h, w):
    B, T, Cin = x.shape
    _, Cout, p, _ = weight.shape
    x_img = x.reshape(B, h, w, Cin)
    out = jnp.einsum("bhwc,cdij->bdhiwj", x_img.astype(jnp.float32),
                     weight.astype(jnp.float32),
                     preferred_element_type=jnp.float32)
    return out.reshape(B, Cout, h * p, w * p)


# --------------------------------- main ------------------------------------- #

if __name__ == "__main__":
    key = jax.random.PRNGKey(0)
    kx, kw, kx2, kw2 = jax.random.split(key, 4)

    fwd = jax.jit(patch_unembedding_pallas, static_argnames=("h", "w"))

    # ---- case 1: B=2, h=w=4, hidden=32, input_dim=4, patch=4 (f32 path) ---- #
    B, h, w = 2, 4, 4
    hidden_dim, input_dim, patch = 32, 4, 4
    T = h * w
    x = jax.random.normal(kx, (B, T, hidden_dim), jnp.float32)
    # The module zero-inits the ConvTranspose2d weight (output identically
    # zero); use small random values so the matmul path is exercised.  The
    # zero-init semantics are checked separately below.
    weight = 0.05 * jax.random.normal(
        kw, (hidden_dim, input_dim, patch, patch), jnp.float32)

    out = jax.block_until_ready(fwd(x, weight, h=h, w=w))
    ref = patch_unembedding_ref(x, weight, h, w)
    assert out.shape == (B, input_dim, h * patch, w * patch), out.shape
    err = float(jnp.max(jnp.abs(out - ref)))
    assert err < 2e-2, err

    # ---- case 2: bf16 activations -> bf16 output (dtype passthrough) ------- #
    out_bf = jax.block_until_ready(fwd(x.astype(jnp.bfloat16), weight, h=h, w=w))
    assert out_bf.dtype == jnp.bfloat16, out_bf.dtype
    err_bf = float(jnp.max(jnp.abs(out_bf.astype(jnp.float32) - ref)))
    assert err_bf < 5e-2, err_bf

    # ---- case 3: non-divisible row count (masked boundary block) ----------- #
    B2, h2, w2 = 2, 5, 5
    hid2, cout2, p2 = 32, 3, 2
    x2 = jax.random.normal(kx2, (B2, h2 * w2, hid2), jnp.float32)
    w2m = 0.05 * jax.random.normal(kw2, (hid2, cout2, p2, p2), jnp.float32)
    out2 = jax.block_until_ready(fwd(x2, w2m, h=h2, w=w2))
    ref2 = patch_unembedding_ref(x2, w2m, h2, w2)
    assert out2.shape == (B2, cout2, h2 * p2, w2 * p2), out2.shape
    err2 = float(jnp.max(jnp.abs(out2 - ref2)))
    assert err2 < 2e-2, err2

    # ---- zero_init() semantics: output must be exactly zero ---------------- #
    out0 = jax.block_until_ready(fwd(x, jnp.zeros_like(weight), h=h, w=w))
    assert float(jnp.max(jnp.abs(out0))) == 0.0

    print("KERNEL_OK")
</pallas_src>

<mosaic_0001>
module attributes {stable_mosaic.version = 11 : i64} {
  func.func @_patch_unembed_kernel(%arg0: i32, %arg1: memref<16x32xf32, #tpu.memory_space<vmem>>, %arg2: memref<32x64xf32, #tpu.memory_space<vmem>>, %arg3: memref<16x64xf32, #tpu.memory_space<vmem>>) attributes {dimension_semantics = [#tpu.dimension_semantics<parallel>], iteration_bounds = array<i64: 2>, scalar_prefetch = 0 : i64, scratch_operands = 0 : i64, tpu.core_type = #tpu.core_type<tc>, window_params = [{transform_indices = @transform_0, window_bounds = array<i64: 16, 32>}, {pipeline_mode = #tpu.pipeline_mode<synchronous>, transform_indices = @transform_1, window_bounds = array<i64: 32, 64>}, {transform_indices = @transform_2, window_bounds = array<i64: 16, 64>}]} {
    %c0 = arith.constant 0 : index
    %c0_0 = arith.constant 0 : index
    %0 = vector.load %arg1[%c0, %c0_0] : memref<16x32xf32, #tpu.memory_space<vmem>>, vector<16x32xf32>
    %c0_1 = arith.constant 0 : index
    %c0_2 = arith.constant 0 : index
    %1 = vector.load %arg2[%c0_1, %c0_2] : memref<32x64xf32, #tpu.memory_space<vmem>>, vector<32x64xf32>
    %cst = arith.constant dense<0.000000e+00> : vector<16x64xf32>
    %2 = tpu.matmul %0, %1, %cst {dimension_numbers = #tpu.dot_dimension_numbers<[1], [0], [0], [1], [0, 0, 1, 1], [], []>} : vector<16x32xf32>, vector<32x64xf32>, vector<16x64xf32> -> vector<16x64xf32>
    %c0_3 = arith.constant 0 : index
    %c0_4 = arith.constant 0 : index
    %3 = vector.load %arg3[%c0_3, %c0_4] : memref<16x64xf32, #tpu.memory_space<vmem>>, vector<16x64xf32>
    tpu.vector_store %arg3[%c0_3, %c0_4], %2 {strides = array<i32>} : memref<16x64xf32, #tpu.memory_space<vmem>>, vector<16x64xf32>,
    return
  }
  func.func @transform_0(%arg0: i32) -> (i32, i32) {
    %c0_i32 = arith.constant 0 : i32
    %c0_i32_0 = arith.constant 0 : i32
    return %arg0, %c0_i32 : i32, i32
  }
  func.func @transform_1(%arg0: i32) -> (i32, i32) {
    %c0_i32 = arith.constant 0 : i32
    %c0_i32_0 = arith.constant 0 : i32
    %c0_i32_1 = arith.constant 0 : i32
    return %c0_i32, %c0_i32_0 : i32, i32
  }
  func.func @transform_2(%arg0: i32) -> (i32, i32) {
    %c0_i32 = arith.constant 0 : i32
    %c0_i32_0 = arith.constant 0 : i32
    return %arg0, %c0_i32 : i32, i32
  }
}

</mosaic_0001>

<llo_original>
// kernel: patch_unembedding_pallas.1
$region0: #{patch_unembedding_pallas.1}
  #allocation0 [shape = 'u32[]', space=smem, size = 0x4, offset = 0x4, fixed_abs, tag = 'smem constant byte address 0x4 - core index']
  #allocation1 [shape = 'u32[72,128]{1,0:T(1,128)}', space=vmem, size = 0x9000, scoped, tag = 'internal scratch']
  %s0 = inlined_call_operand.vmem [shape: f32[32,32], index: 0, kind: input, shape index: {}]
  %s1 = inlined_call_operand.vmem [shape: f32[32,64], index: 1, kind: input, shape index: {}]
  %s2 = inlined_call_operand.vmem [shape: f32[32,64], index: 2, kind: output, shape index: {}]
  %s3 = sld [smem:[#allocation0]]
  $region41: #{patch_unembedding_pallas.1} parent=0
    _
  %s5 = ssub.s32 1, %s3
  %s6 = scalar_select 0, %s5, %s3
  loop: start=0, step=1, limit=4
  $region2: #{patch_unembedding_pallas.1} parent=0 // loop_pre_header
    _
  $region3: #{patch_unembedding_pallas.1} parent=0 // loop_header
    %s8 = sphi 0, %s12
    %p9 = scmp.ge.s32.totalorder %s8, 4
    %s18 = sphi 0, %s20
    %s21 = sphi 0, %s18
    %s22 = sphi 0, %s21
    %s38 = sphi 0, %s22
    %s42 = sphi 0, %s42
    %s44 = sphi 0, %s42
    %s45 = sphi 0, %s44
    %s59 = sphi 0, %s45
    %s65 = sphi 0, %s67
    %s68 = sphi 0, %s65
    %s69 = sphi 0, %s68
    %s85 = sphi 0, %s69
  $region4: #{patch_unembedding_pallas.1} parent=0 // loop_header_branch
    %11 = sbr.rel (%p9) target = $region8
  $region5: #{patch_unembedding_pallas.1} parent=0 // loop_body
    %s13 = ssub.s32 %s8, 1
    %s14 = ssub.s32 %s8, 2
    %s15 = sadd.s32 %s8, 1
    %s16 = ssub.s32 %s8, %s15
    %p17 = scmp.eq.s32.totalorder %s16, 0
    %s19 = sadd.s32 %s18, 1
    %s20 = scalar_select %p17, %s18, %s19
    %p23 = pneg %p17
    %p24 = scmp.eq.s32.totalorder %s8, 1
    %p25 = por %p23, %p24
    %p26 = scmp.ne.s32.totalorder %s18, %s21
    %p27 = scmp.eq.s32.totalorder %s8, 0
    %p28 = por %p26, %p27
    %p29 = scmp.ne.s32.totalorder %s18, %s21
    %p30 = scmp.eq.s32.totalorder %s13, 1
    %p31 = por %p29, %p30
    %p32 = scmp.ne.s32.totalorder %s21, %s22
    %p33 = scmp.eq.s32.totalorder %s13, 0
    %p34 = por %p32, %p33
    %p35 = scmp.ne.s32.totalorder %s21, %s22
    %p36 = scmp.eq.s32.totalorder %s14, 1
    %p37 = por %p35, %p36
    %p39 = scmp.ne.s32.totalorder %s22, %s38
    %p40 = scmp.eq.s32.totalorder %s14, 0
    %p41 = por %p39, %p40
    %s43 = sadd.s32 %s42, 1
    %p46 = scmp.eq.s32.totalorder %s8, 1
    %p47 = scmp.ne.s32.totalorder %s42, %s44
    %p48 = scmp.eq.s32.totalorder %s8, 0
    %p49 = por %p47, %p48
    %p50 = scmp.ne.s32.totalorder %s42, %s44
    %p51 = scmp.eq.s32.totalorder %s13, 1
    %p52 = por %p50, %p51
    %p53 = scmp.ne.s32.totalorder %s44, %s45
    %p54 = scmp.eq.s32.totalorder %s13, 0
    %p55 = por %p53, %p54
    %p56 = scmp.ne.s32.totalorder %s44, %s45
    %p57 = scmp.eq.s32.totalorder %s14, 1
    %p58 = por %p56, %p57
    %p60 = scmp.ne.s32.totalorder %s45, %s59
    %p61 = scmp.eq.s32.totalorder %s14, 0
    %p62 = por %p60, %p61
    %s63 = ssub.s32 %s8, %s15
    %p64 = scmp.eq.s32.totalorder %s63, 0
    %s66 = sadd.s32 %s65, 1
    %s67 = scalar_select %p64, %s65, %s66
    %p70 = pneg %p64
    %p71 = scmp.eq.s32.totalorder %s8, 1
    %p72 = por %p70, %p71
    %p73 = scmp.ne.s32.totalorder %s65, %s68
    %p74 = scmp.eq.s32.totalorder %s8, 0
    %p75 = por %p73, %p74
    %p76 = scmp.ne.s32.totalorder %s65, %s68
    %p77 = scmp.eq.s32.totalorder %s13, 1
    %p78 = por %p76, %p77
    %p79 = scmp.ne.s32.totalorder %s68, %s69
    %p80 = scmp.eq.s32.totalorder %s13, 0
    %p81 = por %p79, %p80
    %p82 = scmp.ne.s32.totalorder %s68, %s69
    %p83 = scmp.eq.s32.totalorder %s14, 1
    %p84 = por %p82, %p83
    %p86 = scmp.ne.s32.totalorder %s69, %s85
    %p87 = scmp.eq.s32.totalorder %s14, 0
    %p88 = por %p86, %p87
    %p89 = scmp.le.s32.totalorder 1, %s8
    %p90 = scmp.lt.s32.totalorder %s8, 3
    %p91 = pnand %p89, %p90
    %p92 = pneg %p91
    // Predicated region
    $region9: #{patch_unembedding_pallas.1} parent=5 // pred_check
      _
    $region10: #{patch_unembedding_pallas.1} parent=5 // pred_check_branch
      %94 = sbr.rel (%p91) target = $region12
    $region11: #{patch_unembedding_pallas.1} parent=5 // pred_region
      %s95 = ssub.s32 %s8, 1
      // Predicated region
      $region13: #{patch_unembedding_pallas.1} parent=11 // pred_check
        %p96 = pneg %p55
      $region14: #{patch_unembedding_pallas.1} parent=11 // pred_check_branch
        %98 = sbr.rel (%p96) target = $region16
      $region15: #{patch_unembedding_pallas.1} parent=11 // pred_region
        _
      $region16: #{patch_unembedding_pallas.1} parent=11 // pred_fallthru
        _
    $region12: #{patch_unembedding_pallas.1} parent=5 // pred_fallthru
      _
    %p99 = scmp.lt.s32.totalorder %s8, 2
    // Predicated region
    $region17: #{patch_unembedding_pallas.1} parent=5 // pred_check
      %p100 = pneg %p99
    $region18: #{patch_unembedding_pallas.1} parent=5 // pred_check_branch
      %102 = sbr.rel (%p100) target = $region20
    $region19: #{patch_unembedding_pallas.1} parent=5 // pred_region
      // Predicated region
      $region21: #{patch_unembedding_pallas.1} parent=19 // pred_check
        %p103 = pneg %p28
      $region22: #{patch_unembedding_pallas.1} parent=19 // pred_check_branch
        %105 = sbr.rel (%p103) target = $region24
      $region23: #{patch_unembedding_pallas.1} parent=19 // pred_region
        %s106 = smul.u32 2, %s8
        %p107 = scmp.lt.s32.totalorder %s106, 3
        %s108 = scalar_select %p107, %s106, 3
        %s109 = smul.addr %s108, 8
        %s110 = scalar_lea.vmem %s0, %s109
        %s111 = smul.u32 2, %s8
      $region24: #{patch_unembedding_pallas.1} parent=19 // pred_fallthru
        _
    $region20: #{patch_unembedding_pallas.1} parent=5 // pred_fallthru
      _
    %p112 = scmp.le.s32.totalorder 1, %s8
    %p113 = scmp.lt.s32.totalorder %s8, 3
    %p114 = pnand %p112, %p113
    %p115 = pneg %p114
    // Predicated region
    $region25: #{patch_unembedding_pallas.1} parent=5 // pred_check
      _
    $region26: #{patch_unembedding_pallas.1} parent=5 // pred_check_branch
      %117 = sbr.rel (%p114) target = $region28
    $region27: #{patch_unembedding_pallas.1} parent=5 // pred_region
      %s118 = ssub.s32 %s8, 1
      %s119 = smul.u32 2, %s13
      %p120 = scmp.lt.s32.totalorder %s119, 3
      %s121 = scalar_select %p120, %s119, 3
      %s122 = smul.addr %s121, 8
      %s123 = scalar_lea.vmem %s0, %s122
      %p124 = pneg %p34
      %p125 = pneg %p31
      %p126 = pneg %p55
      %p127 = pneg %p52
      %p128 = pneg %p81
      %p129 = pneg %p78
      %s130 = smul.u32 2, %s13
      %p131 = scmp.lt.s32.totalorder %s130, 3
      %s132 = scalar_select %p131, %s130, 3
      %s133 = smul.addr %s132, 8
      %s134 = scalar_lea.vmem %s2, %s133
      %s135 = smul.u32 2, %s13
      %p136 = scmp.lt.s32.totalorder %s135, 3
      %s137 = scalar_select %p136, %s135, 3
      %s138 = smul.addr %s137, 8
      %s139 = scalar_lea.vmem %s0, %s138
      %s140 = smul.u32 2, %s13
      %s141 = smul.u32 2, %s13
      %p142 = scmp.lt.s32.totalorder %s141, 3
      %s143 = scalar_select %p142, %s141, 3
      %s144 = smul.addr %s143, 8
      %s145 = scalar_lea.vmem %s2, %s144
      %s146 = smul.u32 2, %s13
      %v147 = vld [vmem:[%s139] sm:$0xff]
      %v148 = vld [vmem:[%s139 + $0x8] sm:$0xff]
      %v149 = vld [vmem:[%s1] sm:$0xff]
      %v150 = vld [vmem:[%s1 + $0x8] sm:$0xff]
      %v151 = vld [vmem:[%s1 + $0x10] sm:$0xff]
      %v152 = vld [vmem:[%s1 + $0x18] sm:$0xff]
      %vm153 = vcmask 261120
      %v155 = vsel %vm153, %v147, 0
      %v158 = vsel %vm153, %v148, 0
      %160 = vmatpush.msra.mxu0 0.0
      %161 = vmatpush.msra.mxu0 0.0
      %162 = vmatpush.msra.mxu0 0.0
      %163 = vmatpush.msra.mxu0 0.0
      %164 = vmatpush.msra.mxu0 0.0
      %165 = vmatpush.msra.mxu0 0.0
      %166 = vmatpush.msra.mxu0 0.0
      %167 = vmatpush.msra.mxu0 0.0
      %168 = vmatpush.msra.mxu0 0.0
      %169 = vmatpush.msra.mxu0 0.0
      %170 = vmatpush.msra.mxu0 0.0
      %171 = vmatpush.msra.mxu0 0.0
      %172 = vmatpush.msra.mxu0 %v152
      %173 = vmatpush.msra.mxu0 %v151
      %174 = vmatpush.msra.mxu0 %v150
      %175 = vmatpush.msra.mxu0 %v149
      %176 = vmatmul.f32.gmra.mxu0 %v155
      %v177 = vpop.f32.mrf.mxu0
      %v178 = vadd.f32 0.0, %v177
      %179 = vmatmul.f32.gmra.mxu0 %v158
      %v180 = vpop.f32.mrf.mxu0
      %v181 = vadd.f32 0.0, %v180
      %182 = vdwg.mxu0
      %vm183 = vcmask 523264
      %184 = vst.msk [vmem:[%s145] sm:$0xff] %vm183, %v178
      %185 = vst.msk [vmem:[%s145 + $0x8] sm:$0xff] %vm183, %v181
      %s186 = smul.u32 2, %s13
      %p187 = scmp.lt.s32.totalorder %s186, 3
      %s188 = scalar_select %p187, %s186, 3
      %s189 = smul.addr %s188, 8
      %s190 = scalar_lea.vmem %s2, %s189
      // Predicated region
      $region29: #{patch_unembedding_pallas.1} parent=27 // pred_check
        %p191 = pneg %p78
      $region30: #{patch_unembedding_pallas.1} parent=27 // pred_check_branch
        %193 = sbr.rel (%p191) target = $region32
      $region31: #{patch_unembedding_pallas.1} parent=27 // pred_region
        %s194 = smul.u32 2, %s13
      $region32: #{patch_unembedding_pallas.1} parent=27 // pred_fallthru
        _
    $region28: #{patch_unembedding_pallas.1} parent=5 // pred_fallthru
      _
    %p195 = scmp.le.s32.totalorder 2, %s8
    // Predicated region
    $region33: #{patch_unembedding_pallas.1} parent=5 // pred_check
      %p196 = pneg %p195
    $region34: #{patch_unembedding_pallas.1} parent=5 // pred_check_branch
      %198 = sbr.rel (%p196) target = $region36
    $region35: #{patch_unembedding_pallas.1} parent=5 // pred_region
      %s199 = ssub.s32 %s8, 2
      // Predicated region
      $region37: #{patch_unembedding_pallas.1} parent=35 // pred_check
        %p200 = pneg %p84
      $region38: #{patch_unembedding_pallas.1} parent=35 // pred_check_branch
        %202 = sbr.rel (%p200) target = $region40
      $region39: #{patch_unembedding_pallas.1} parent=35 // pred_region
        %s203 = smul.u32 2, %s14
        %p204 = scmp.lt.s32.totalorder %s203, 3
        %s205 = scalar_select %p204, %s203, 3
        %s206 = smul.addr %s205, 8
        %s207 = scalar_lea.vmem %s2, %s206
      $region40: #{patch_unembedding_pallas.1} parent=35 // pred_fallthru
        _
    $region36: #{patch_unembedding_pallas.1} parent=5 // pred_fallthru
      _
  $region6: #{patch_unembedding_pallas.1} parent=0 // loop_footer
    %s12 = sadd.s32 1, %s8
  $region7: #{patch_unembedding_pallas.1} parent=0 // loop_footer_branch
    %7 = sbr.rel target = $region3
  $region8: #{patch_unembedding_pallas.1} parent=0 // loop_exit
    _

</llo_original>
